<compile_context>
chip_gen: v5e
topology: v5e:2x2
jax: 0.10.0
libtpu: 0.0.40
codegen_flags: <defaults>
</compile_context>

<pallas_src>
import functools

import jax
import jax.numpy as jnp
from jax.experimental import pallas as pl
from jax.experimental.pallas import tpu as pltpu


def _pair(v):
    return tuple(v) if isinstance(v, (tuple, list)) else (int(v), int(v))


def _round_up(x, m):
    return ((x + m - 1) // m) * m


# ----------------------------------------------------------------------------
# Pallas kernel: fused conv (kh*kw shifted matmuls) + BN bias + LeakyReLU
# ----------------------------------------------------------------------------
def _conv_bn_leaky_kernel(x_ref, w_ref, b_ref, o_ref, *, wp, kw, n_off, lq, slope):
    # x_ref: (Cin, Lin)         flattened zero-padded input row (bf16)
    # w_ref: (kh*kw, Cout, Cin) BN-scale-folded conv weights (bf16)
    # b_ref: (Cout, 1)          folded BN bias (f32)
    # o_ref: (Cout, Lq)         lane-dense output block (Lq multiple of 128)
    xv = x_ref[...]                                   # load once, slice in vregs
    acc = jnp.zeros(o_ref.shape, jnp.float32)
    for r in range(n_off):                            # static, unrolled (kh*kw)
        off = (r // kw) * wp + (r % kw)               # static flat shift (ki,kj)
        acc = acc + jnp.dot(w_ref[r], xv[:, off:off + lq],
                            preferred_element_type=jnp.float32)
    y = acc + b_ref[...]                              # BN bias (scale pre-folded)
    o_ref[...] = jnp.where(y > 0, y, y * slope)       # LeakyReLU


# ----------------------------------------------------------------------------
# Wrapper: parameter folding + flat-offset layout + pallas_call
# ----------------------------------------------------------------------------
def conv2d_batch_leaky(x_nchw, weight_oihw, gamma, beta, running_mean,
                       running_var, stride, padding, leaky_slope=0.1, eps=1e-5):
    """Forward of Conv2dBatchLeaky. x_nchw: (N, Cin, H, W) -> (N, Cout, Ho, Wo)."""
    Cout, Cin, Kh, Kw = weight_oihw.shape
    N, _, H, W = x_nchw.shape
    sh, sw = _pair(stride)
    ph, pw = _pair(padding)
    Hp, Wp = H + 2 * ph, W + 2 * pw
    Ho = (Hp - Kh) // sh + 1
    Wo = (Wp - Kw) // sw + 1

    # Fold eval-mode BatchNorm into the conv weight (per-Cout scale) + a bias.
    scale = gamma / jnp.sqrt(running_var + eps)                       # (Cout,)
    bias = (beta - running_mean * scale).astype(jnp.float32).reshape(Cout, 1)
    w_folded = weight_oihw.astype(jnp.float32) * scale[:, None, None, None]
    # (Cout, Cin, Kh, Kw) -> (Kh*Kw, Cout, Cin), tap index r = ki*Kw + kj.
    w_r = jnp.transpose(w_folded, (2, 3, 0, 1)).reshape(Kh * Kw, Cout, Cin)
    w_r = w_r.astype(jnp.bfloat16)

    # Flat-offset layout: output pixel (oh, ow) lives at flat index
    # q = oh*sh*Wp + ow*sw, and kernel tap (ki, kj) reads flat input index
    # q + (ki*Wp + kj).  Pad the flat tail with zeros so every shifted read in
    # the kernel stays in bounds; invalid q positions are cropped afterwards.
    Lq = _round_up(sh * Wp * Ho, 128)           # flat output length (lane dim)
    max_off = (Kh - 1) * Wp + (Kw - 1)
    Lin = Lq + max_off
    xp = jnp.pad(x_nchw.astype(jnp.bfloat16),
                 ((0, 0), (0, 0), (ph, ph), (pw, pw)))
    xf = xp.reshape(N, Cin, Hp * Wp)
    xf = jnp.pad(xf, ((0, 0), (0, 0), (0, max(0, Lin - Hp * Wp))))

    kernel = functools.partial(_conv_bn_leaky_kernel, wp=Wp, kw=Kw,
                               n_off=Kh * Kw, lq=Lq, slope=float(leaky_slope))

    out_flat = pl.pallas_call(
        kernel,
        out_shape=jax.ShapeDtypeStruct((N, Cout, Lq), jnp.float32),
        grid_spec=pltpu.PrefetchScalarGridSpec(
            num_scalar_prefetch=0,
            grid=(N,),
            in_specs=[
                pl.BlockSpec((None, Cin, Lin), lambda n: (n, 0, 0)),
                pl.BlockSpec((Kh * Kw, Cout, Cin), lambda n: (0, 0, 0)),
                pl.BlockSpec((Cout, 1), lambda n: (0, 0)),
            ],
            out_specs=pl.BlockSpec((None, Cout, Lq), lambda n: (n, 0, 0)),
        ),
        compiler_params=pltpu.CompilerParams(
            dimension_semantics=("parallel",)),
    )(xf, w_r, bias)

    # Un-flatten: rows are sh*Wp apart in q, columns are sw apart; crop to Wo.
    out = out_flat[:, :, :sh * Wp * Ho].reshape(N, Cout, Ho, sh * Wp)
    out = out[:, :, :, ::sw][:, :, :, :Wo]
    return out


# ----------------------------------------------------------------------------
# Pure-JAX reference for validation
# ----------------------------------------------------------------------------
def _reference(x_nchw, weight_oihw, gamma, beta, running_mean, running_var,
               stride, padding, leaky_slope=0.1, eps=1e-5):
    conv = jax.lax.conv_general_dilated(
        x_nchw.astype(jnp.float32), weight_oihw.astype(jnp.float32),
        window_strides=(stride, stride),
        padding=((padding, padding), (padding, padding)),
        dimension_numbers=("NCHW", "OIHW", "NCHW"))
    scale = (gamma / jnp.sqrt(running_var + eps)).reshape(1, -1, 1, 1)
    bias = (beta - running_mean * gamma / jnp.sqrt(running_var + eps)).reshape(1, -1, 1, 1)
    y = conv * scale + bias
    return jnp.where(y > 0, y, y * leaky_slope)


if __name__ == "__main__":
    # Module config: Conv2dBatchLeaky(in_channels=4, out_channels=8,
    #                                 kernel_size=3, stride=1, padding=1)
    in_channels, out_channels = 4, 8
    kernel_size, stride, padding = 3, 1, 1
    leaky_slope = 0.1

    key = jax.random.PRNGKey(0)
    kx, kw = jax.random.split(key)

    x = jax.random.normal(kx, (2, in_channels, 16, 16), dtype=jnp.float32)
    weight = 0.1 * jax.random.normal(
        kw, (out_channels, in_channels, kernel_size, kernel_size), dtype=jnp.float32)

    # Deterministic BatchNorm parameters / running statistics.
    gamma = 1.0 + 0.05 * jnp.arange(out_channels, dtype=jnp.float32)
    beta = 0.02 * jnp.arange(out_channels, dtype=jnp.float32)
    running_mean = 0.01 * jnp.arange(out_channels, dtype=jnp.float32)
    running_var = 1.0 + 0.1 * jnp.arange(out_channels, dtype=jnp.float32)

    fwd = jax.jit(conv2d_batch_leaky,
                  static_argnames=("stride", "padding", "leaky_slope", "eps"))
    out = fwd(x, weight, gamma, beta, running_mean, running_var,
              stride=stride, padding=padding, leaky_slope=leaky_slope)
    out = jax.block_until_ready(out)

    ref = _reference(x, weight, gamma, beta, running_mean, running_var,
                     stride, padding, leaky_slope)
    assert out.shape == (2, out_channels, 16, 16), out.shape
    # bf16 MXU inputs -> looser tolerance than the previous all-f32 version.
    assert jnp.allclose(out, ref, atol=2e-2, rtol=2e-2), \
        float(jnp.max(jnp.abs(out - ref)))

    print("KERNEL_OK")
</pallas_src>

<mosaic_0001>
module attributes {stable_mosaic.version = 11 : i64} {
  func.func @_conv_bn_leaky_kernel(%arg0: i32, %arg1: memref<1x4x422xbf16, #tpu.memory_space<vmem>>, %arg2: memref<9x8x4xbf16, #tpu.memory_space<vmem>>, %arg3: memref<8x1xf32, #tpu.memory_space<vmem>>, %arg4: memref<1x8x384xf32, #tpu.memory_space<vmem>>) attributes {dimension_semantics = [#tpu.dimension_semantics<parallel>], iteration_bounds = array<i64: 2>, scalar_prefetch = 0 : i64, scratch_operands = 0 : i64, tpu.core_type = #tpu.core_type<tc>, window_params = [{transform_indices = @transform_0, window_bounds = array<i64: 1, 4, 422>}, {pipeline_mode = #tpu.pipeline_mode<synchronous>, transform_indices = @transform_1, window_bounds = array<i64: 9, 8, 4>}, {pipeline_mode = #tpu.pipeline_mode<synchronous>, transform_indices = @transform_2, window_bounds = array<i64: 8, 1>}, {transform_indices = @transform_3, window_bounds = array<i64: 1, 8, 384>}]} {
    %c0 = arith.constant 0 : index
    %c0_0 = arith.constant 0 : index
    %c0_1 = arith.constant 0 : index
    %0 = vector.load %arg1[%c0, %c0_0, %c0_1] : memref<1x4x422xbf16, #tpu.memory_space<vmem>>, vector<1x4x422xbf16>
    %1 = vector.shape_cast %0 : vector<1x4x422xbf16> to vector<4x422xbf16>
    %cst = arith.constant 0.000000e+00 : f32
    %2 = vector.broadcast %cst : f32 to vector<8x384xf32>
    %c0_2 = arith.constant 0 : index
    %c0_3 = arith.constant 0 : index
    %c0_4 = arith.constant 0 : index
    %3 = vector.load %arg2[%c0_2, %c0_3, %c0_4] : memref<9x8x4xbf16, #tpu.memory_space<vmem>>, vector<1x8x4xbf16>
    %4 = vector.shape_cast %3 : vector<1x8x4xbf16> to vector<8x4xbf16>
    %5 = vector.extract_strided_slice %1 {offsets = [0, 0], sizes = [4, 384], strides = [1, 1]} : vector<4x422xbf16> to vector<4x384xbf16>
    %cst_5 = arith.constant dense<0.000000e+00> : vector<8x384xf32>
    %6 = tpu.matmul %4, %5, %cst_5 {dimension_numbers = #tpu.dot_dimension_numbers<[1], [0], [0], [1], [0, 0, 1, 1], [], []>} : vector<8x4xbf16>, vector<4x384xbf16>, vector<8x384xf32> -> vector<8x384xf32>
    %7 = arith.addf %2, %6 : vector<8x384xf32>
    %c1 = arith.constant 1 : index
    %c0_6 = arith.constant 0 : index
    %c0_7 = arith.constant 0 : index
    %8 = vector.load %arg2[%c1, %c0_6, %c0_7] : memref<9x8x4xbf16, #tpu.memory_space<vmem>>, vector<1x8x4xbf16>
    %9 = vector.shape_cast %8 : vector<1x8x4xbf16> to vector<8x4xbf16>
    %10 = vector.extract_strided_slice %1 {offsets = [0, 1], sizes = [4, 384], strides = [1, 1]} : vector<4x422xbf16> to vector<4x384xbf16>
    %cst_8 = arith.constant dense<0.000000e+00> : vector<8x384xf32>
    %11 = tpu.matmul %9, %10, %cst_8 {dimension_numbers = #tpu.dot_dimension_numbers<[1], [0], [0], [1], [0, 0, 1, 1], [], []>} : vector<8x4xbf16>, vector<4x384xbf16>, vector<8x384xf32> -> vector<8x384xf32>
    %12 = arith.addf %7, %11 : vector<8x384xf32>
    %c2 = arith.constant 2 : index
    %c0_9 = arith.constant 0 : index
    %c0_10 = arith.constant 0 : index
    %13 = vector.load %arg2[%c2, %c0_9, %c0_10] : memref<9x8x4xbf16, #tpu.memory_space<vmem>>, vector<1x8x4xbf16>
    %14 = vector.shape_cast %13 : vector<1x8x4xbf16> to vector<8x4xbf16>
    %15 = vector.extract_strided_slice %1 {offsets = [0, 2], sizes = [4, 384], strides = [1, 1]} : vector<4x422xbf16> to vector<4x384xbf16>
    %cst_11 = arith.constant dense<0.000000e+00> : vector<8x384xf32>
    %16 = tpu.matmul %14, %15, %cst_11 {dimension_numbers = #tpu.dot_dimension_numbers<[1], [0], [0], [1], [0, 0, 1, 1], [], []>} : vector<8x4xbf16>, vector<4x384xbf16>, vector<8x384xf32> -> vector<8x384xf32>
    %17 = arith.addf %12, %16 : vector<8x384xf32>
    %c3 = arith.constant 3 : index
    %c0_12 = arith.constant 0 : index
    %c0_13 = arith.constant 0 : index
    %18 = vector.load %arg2[%c3, %c0_12, %c0_13] : memref<9x8x4xbf16, #tpu.memory_space<vmem>>, vector<1x8x4xbf16>
    %19 = vector.shape_cast %18 : vector<1x8x4xbf16> to vector<8x4xbf16>
    %20 = vector.extract_strided_slice %1 {offsets = [0, 18], sizes = [4, 384], strides = [1, 1]} : vector<4x422xbf16> to vector<4x384xbf16>
    %cst_14 = arith.constant dense<0.000000e+00> : vector<8x384xf32>
    %21 = tpu.matmul %19, %20, %cst_14 {dimension_numbers = #tpu.dot_dimension_numbers<[1], [0], [0], [1], [0, 0, 1, 1], [], []>} : vector<8x4xbf16>, vector<4x384xbf16>, vector<8x384xf32> -> vector<8x384xf32>
    %22 = arith.addf %17, %21 : vector<8x384xf32>
    %c4 = arith.constant 4 : index
    %c0_15 = arith.constant 0 : index
    %c0_16 = arith.constant 0 : index
    %23 = vector.load %arg2[%c4, %c0_15, %c0_16] : memref<9x8x4xbf16, #tpu.memory_space<vmem>>, vector<1x8x4xbf16>
    %24 = vector.shape_cast %23 : vector<1x8x4xbf16> to vector<8x4xbf16>
    %25 = vector.extract_strided_slice %1 {offsets = [0, 19], sizes = [4, 384], strides = [1, 1]} : vector<4x422xbf16> to vector<4x384xbf16>
    %cst_17 = arith.constant dense<0.000000e+00> : vector<8x384xf32>
    %26 = tpu.matmul %24, %25, %cst_17 {dimension_numbers = #tpu.dot_dimension_numbers<[1], [0], [0], [1], [0, 0, 1, 1], [], []>} : vector<8x4xbf16>, vector<4x384xbf16>, vector<8x384xf32> -> vector<8x384xf32>
    %27 = arith.addf %22, %26 : vector<8x384xf32>
    %c5 = arith.constant 5 : index
    %c0_18 = arith.constant 0 : index
    %c0_19 = arith.constant 0 : index
    %28 = vector.load %arg2[%c5, %c0_18, %c0_19] : memref<9x8x4xbf16, #tpu.memory_space<vmem>>, vector<1x8x4xbf16>
    %29 = vector.shape_cast %28 : vector<1x8x4xbf16> to vector<8x4xbf16>
    %30 = vector.extract_strided_slice %1 {offsets = [0, 20], sizes = [4, 384], strides = [1, 1]} : vector<4x422xbf16> to vector<4x384xbf16>
    %cst_20 = arith.constant dense<0.000000e+00> : vector<8x384xf32>
    %31 = tpu.matmul %29, %30, %cst_20 {dimension_numbers = #tpu.dot_dimension_numbers<[1], [0], [0], [1], [0, 0, 1, 1], [], []>} : vector<8x4xbf16>, vector<4x384xbf16>, vector<8x384xf32> -> vector<8x384xf32>
    %32 = arith.addf %27, %31 : vector<8x384xf32>
    %c6 = arith.constant 6 : index
    %c0_21 = arith.constant 0 : index
    %c0_22 = arith.constant 0 : index
    %33 = vector.load %arg2[%c6, %c0_21, %c0_22] : memref<9x8x4xbf16, #tpu.memory_space<vmem>>, vector<1x8x4xbf16>
    %34 = vector.shape_cast %33 : vector<1x8x4xbf16> to vector<8x4xbf16>
    %35 = vector.extract_strided_slice %1 {offsets = [0, 36], sizes = [4, 384], strides = [1, 1]} : vector<4x422xbf16> to vector<4x384xbf16>
    %cst_23 = arith.constant dense<0.000000e+00> : vector<8x384xf32>
    %36 = tpu.matmul %34, %35, %cst_23 {dimension_numbers = #tpu.dot_dimension_numbers<[1], [0], [0], [1], [0, 0, 1, 1], [], []>} : vector<8x4xbf16>, vector<4x384xbf16>, vector<8x384xf32> -> vector<8x384xf32>
    %37 = arith.addf %32, %36 : vector<8x384xf32>
    %c7 = arith.constant 7 : index
    %c0_24 = arith.constant 0 : index
    %c0_25 = arith.constant 0 : index
    %38 = vector.load %arg2[%c7, %c0_24, %c0_25] : memref<9x8x4xbf16, #tpu.memory_space<vmem>>, vector<1x8x4xbf16>
    %39 = vector.shape_cast %38 : vector<1x8x4xbf16> to vector<8x4xbf16>
    %40 = vector.extract_strided_slice %1 {offsets = [0, 37], sizes = [4, 384], strides = [1, 1]} : vector<4x422xbf16> to vector<4x384xbf16>
    %cst_26 = arith.constant dense<0.000000e+00> : vector<8x384xf32>
    %41 = tpu.matmul %39, %40, %cst_26 {dimension_numbers = #tpu.dot_dimension_numbers<[1], [0], [0], [1], [0, 0, 1, 1], [], []>} : vector<8x4xbf16>, vector<4x384xbf16>, vector<8x384xf32> -> vector<8x384xf32>
    %42 = arith.addf %37, %41 : vector<8x384xf32>
    %c8 = arith.constant 8 : index
    %c0_27 = arith.constant 0 : index
    %c0_28 = arith.constant 0 : index
    %43 = vector.load %arg2[%c8, %c0_27, %c0_28] : memref<9x8x4xbf16, #tpu.memory_space<vmem>>, vector<1x8x4xbf16>
    %44 = vector.shape_cast %43 : vector<1x8x4xbf16> to vector<8x4xbf16>
    %45 = vector.extract_strided_slice %1 {offsets = [0, 38], sizes = [4, 384], strides = [1, 1]} : vector<4x422xbf16> to vector<4x384xbf16>
    %cst_29 = arith.constant dense<0.000000e+00> : vector<8x384xf32>
    %46 = tpu.matmul %44, %45, %cst_29 {dimension_numbers = #tpu.dot_dimension_numbers<[1], [0], [0], [1], [0, 0, 1, 1], [], []>} : vector<8x4xbf16>, vector<4x384xbf16>, vector<8x384xf32> -> vector<8x384xf32>
    %47 = arith.addf %42, %46 : vector<8x384xf32>
    %c0_30 = arith.constant 0 : index
    %c0_31 = arith.constant 0 : index
    %48 = vector.load %arg3[%c0_30, %c0_31] : memref<8x1xf32, #tpu.memory_space<vmem>>, vector<8x1xf32>
    %49 = vector.broadcast %48 : vector<8x1xf32> to vector<8x384xf32>
    %50 = arith.addf %47, %49 : vector<8x384xf32>
    %cst_32 = arith.constant 0.000000e+00 : f32
    %51 = vector.broadcast %cst_32 : f32 to vector<8x384xf32>
    %52 = arith.cmpf ogt, %50, %51 : vector<8x384xf32>
    %cst_33 = arith.constant 1.000000e-01 : f32
    %53 = vector.broadcast %cst_33 : f32 to vector<8x384xf32>
    %54 = arith.mulf %50, %53 : vector<8x384xf32>
    %55 = arith.select %52, %50, %54 : vector<8x384xi1>, vector<8x384xf32>
    %c0_34 = arith.constant 0 : index
    %c0_35 = arith.constant 0 : index
    %c0_36 = arith.constant 0 : index
    %56 = vector.load %arg4[%c0_34, %c0_35, %c0_36] : memref<1x8x384xf32, #tpu.memory_space<vmem>>, vector<1x8x384xf32>
    %57 = vector.shape_cast %56 : vector<1x8x384xf32> to vector<8x384xf32>
    %58 = vector.shape_cast %55 : vector<8x384xf32> to vector<1x8x384xf32>
    tpu.vector_store %arg4[%c0_34, %c0_35, %c0_36], %58 {strides = array<i32>} : memref<1x8x384xf32, #tpu.memory_space<vmem>>, vector<1x8x384xf32>,
    return
  }
  func.func @transform_0(%arg0: i32) -> (i32, i32, i32) {
    %c0_i32 = arith.constant 0 : i32
    %c0_i32_0 = arith.constant 0 : i32
    %c0_i32_1 = arith.constant 0 : i32
    return %arg0, %c0_i32, %c0_i32_0 : i32, i32, i32
  }
  func.func @transform_1(%arg0: i32) -> (i32, i32, i32) {
    %c0_i32 = arith.constant 0 : i32
    %c0_i32_0 = arith.constant 0 : i32
    %c0_i32_1 = arith.constant 0 : i32
    %c0_i32_2 = arith.constant 0 : i32
    return %c0_i32, %c0_i32_0, %c0_i32_1 : i32, i32, i32
  }
  func.func @transform_2(%arg0: i32) -> (i32, i32) {
    %c0_i32 = arith.constant 0 : i32
    %c0_i32_0 = arith.constant 0 : i32
    %c0_i32_1 = arith.constant 0 : i32
    return %c0_i32, %c0_i32_0 : i32, i32
  }
  func.func @transform_3(%arg0: i32) -> (i32, i32, i32) {
    %c0_i32 = arith.constant 0 : i32
    %c0_i32_0 = arith.constant 0 : i32
    %c0_i32_1 = arith.constant 0 : i32
    return %arg0, %c0_i32, %c0_i32_0 : i32, i32, i32
  }
}

</mosaic_0001>

<llo_original>
// kernel: conv2d_batch_leaky.1
$region0: #{conv2d_batch_leaky.1}
  #allocation0 [shape = 'u32[]', space=smem, size = 0x4, offset = 0x4, fixed_abs, tag = 'smem constant byte address 0x4 - core index']
  #allocation1 [shape = 'u32[72,128]{1,0:T(1,128)}', space=vmem, size = 0x9000, scoped, tag = 'internal scratch']
  %s0 = inlined_call_operand.vmem [shape: bf16[2,4,422], index: 0, kind: input, shape index: {}]
  %s1 = inlined_call_operand.vmem [shape: bf16[9,8,4], index: 1, kind: input, shape index: {}]
  %s2 = inlined_call_operand.vmem [shape: f32[8,1], index: 2, kind: input, shape index: {}]
  %s3 = inlined_call_operand.vmem [shape: f32[2,8,384], index: 3, kind: output, shape index: {}]
  %s4 = sld [smem:[#allocation0]]
  $region45: #{conv2d_batch_leaky.1} parent=0
    _
  %s6 = ssub.s32 1, %s4
  %s7 = scalar_select 0, %s6, %s4
  loop: start=0, step=1, limit=4
  $region2: #{conv2d_batch_leaky.1} parent=0 // loop_pre_header
    _
  $region3: #{conv2d_batch_leaky.1} parent=0 // loop_header
    %s9 = sphi 0, %s13
    %p10 = scmp.ge.s32.totalorder %s9, 4
    %s19 = sphi 0, %s21
    %s22 = sphi 0, %s19
    %s23 = sphi 0, %s22
    %s39 = sphi 0, %s23
    %s43 = sphi 0, %s43
    %s45 = sphi 0, %s43
    %s46 = sphi 0, %s45
    %s60 = sphi 0, %s46
    %s64 = sphi 0, %s64
    %s66 = sphi 0, %s64
    %s67 = sphi 0, %s66
    %s81 = sphi 0, %s67
    %s87 = sphi 0, %s89
    %s90 = sphi 0, %s87
    %s91 = sphi 0, %s90
    %s107 = sphi 0, %s91
  $region4: #{conv2d_batch_leaky.1} parent=0 // loop_header_branch
    %12 = sbr.rel (%p10) target = $region8
  $region5: #{conv2d_batch_leaky.1} parent=0 // loop_body
    %s14 = ssub.s32 %s9, 1
    %s15 = ssub.s32 %s9, 2
    %s16 = sadd.s32 %s9, 1
    %s17 = ssub.s32 %s9, %s16
    %p18 = scmp.eq.s32.totalorder %s17, 0
    %s20 = sadd.s32 %s19, 1
    %s21 = scalar_select %p18, %s19, %s20
    %p24 = pneg %p18
    %p25 = scmp.eq.s32.totalorder %s9, 1
    %p26 = por %p24, %p25
    %p27 = scmp.ne.s32.totalorder %s19, %s22
    %p28 = scmp.eq.s32.totalorder %s9, 0
    %p29 = por %p27, %p28
    %p30 = scmp.ne.s32.totalorder %s19, %s22
    %p31 = scmp.eq.s32.totalorder %s14, 1
    %p32 = por %p30, %p31
    %p33 = scmp.ne.s32.totalorder %s22, %s23
    %p34 = scmp.eq.s32.totalorder %s14, 0
    %p35 = por %p33, %p34
    %p36 = scmp.ne.s32.totalorder %s22, %s23
    %p37 = scmp.eq.s32.totalorder %s15, 1
    %p38 = por %p36, %p37
    %p40 = scmp.ne.s32.totalorder %s23, %s39
    %p41 = scmp.eq.s32.totalorder %s15, 0
    %p42 = por %p40, %p41
    %s44 = sadd.s32 %s43, 1
    %p47 = scmp.eq.s32.totalorder %s9, 1
    %p48 = scmp.ne.s32.totalorder %s43, %s45
    %p49 = scmp.eq.s32.totalorder %s9, 0
    %p50 = por %p48, %p49
    %p51 = scmp.ne.s32.totalorder %s43, %s45
    %p52 = scmp.eq.s32.totalorder %s14, 1
    %p53 = por %p51, %p52
    %p54 = scmp.ne.s32.totalorder %s45, %s46
    %p55 = scmp.eq.s32.totalorder %s14, 0
    %p56 = por %p54, %p55
    %p57 = scmp.ne.s32.totalorder %s45, %s46
    %p58 = scmp.eq.s32.totalorder %s15, 1
    %p59 = por %p57, %p58
    %p61 = scmp.ne.s32.totalorder %s46, %s60
    %p62 = scmp.eq.s32.totalorder %s15, 0
    %p63 = por %p61, %p62
    %s65 = sadd.s32 %s64, 1
    %p68 = scmp.eq.s32.totalorder %s9, 1
    %p69 = scmp.ne.s32.totalorder %s64, %s66
    %p70 = scmp.eq.s32.totalorder %s9, 0
    %p71 = por %p69, %p70
    %p72 = scmp.ne.s32.totalorder %s64, %s66
    %p73 = scmp.eq.s32.totalorder %s14, 1
    %p74 = por %p72, %p73
    %p75 = scmp.ne.s32.totalorder %s66, %s67
    %p76 = scmp.eq.s32.totalorder %s14, 0
    %p77 = por %p75, %p76
    %p78 = scmp.ne.s32.totalorder %s66, %s67
    %p79 = scmp.eq.s32.totalorder %s15, 1
    %p80 = por %p78, %p79
    %p82 = scmp.ne.s32.totalorder %s67, %s81
    %p83 = scmp.eq.s32.totalorder %s15, 0
    %p84 = por %p82, %p83
    %s85 = ssub.s32 %s9, %s16
    %p86 = scmp.eq.s32.totalorder %s85, 0
    %s88 = sadd.s32 %s87, 1
    %s89 = scalar_select %p86, %s87, %s88
    %p92 = pneg %p86
    %p93 = scmp.eq.s32.totalorder %s9, 1
    %p94 = por %p92, %p93
    %p95 = scmp.ne.s32.totalorder %s87, %s90
    %p96 = scmp.eq.s32.totalorder %s9, 0
    %p97 = por %p95, %p96
    %p98 = scmp.ne.s32.totalorder %s87, %s90
    %p99 = scmp.eq.s32.totalorder %s14, 1
    %p100 = por %p98, %p99
    %p101 = scmp.ne.s32.totalorder %s90, %s91
    %p102 = scmp.eq.s32.totalorder %s14, 0
    %p103 = por %p101, %p102
    %p104 = scmp.ne.s32.totalorder %s90, %s91
    %p105 = scmp.eq.s32.totalorder %s15, 1
    %p106 = por %p104, %p105
    %p108 = scmp.ne.s32.totalorder %s91, %s107
    %p109 = scmp.eq.s32.totalorder %s15, 0
    %p110 = por %p108, %p109
    %p111 = scmp.le.s32.totalorder 1, %s9
    %p112 = scmp.lt.s32.totalorder %s9, 3
    %p113 = pnand %p111, %p112
    %p114 = pneg %p113
    // Predicated region
    $region9: #{conv2d_batch_leaky.1} parent=5 // pred_check
      _
    $region10: #{conv2d_batch_leaky.1} parent=5 // pred_check_branch
      %116 = sbr.rel (%p113) target = $region12
    $region11: #{conv2d_batch_leaky.1} parent=5 // pred_region
      %s117 = ssub.s32 %s9, 1
      // Predicated region
      $region13: #{conv2d_batch_leaky.1} parent=11 // pred_check
        %p118 = pneg %p56
      $region14: #{conv2d_batch_leaky.1} parent=11 // pred_check_branch
        %120 = sbr.rel (%p118) target = $region16
      $region15: #{conv2d_batch_leaky.1} parent=11 // pred_region
        _
      $region16: #{conv2d_batch_leaky.1} parent=11 // pred_fallthru
        _
      // Predicated region
      $region17: #{conv2d_batch_leaky.1} parent=11 // pred_check
        %p121 = pneg %p77
      $region18: #{conv2d_batch_leaky.1} parent=11 // pred_check_branch
        %123 = sbr.rel (%p121) target = $region20
      $region19: #{conv2d_batch_leaky.1} parent=11 // pred_region
        _
      $region20: #{conv2d_batch_leaky.1} parent=11 // pred_fallthru
        _
    $region12: #{conv2d_batch_leaky.1} parent=5 // pred_fallthru
      _
    %p124 = scmp.lt.s32.totalorder %s9, 2
    // Predicated region
    $region21: #{conv2d_batch_leaky.1} parent=5 // pred_check
      %p125 = pneg %p124
    $region22: #{conv2d_batch_leaky.1} parent=5 // pred_check_branch
      %127 = sbr.rel (%p125) target = $region24
    $region23: #{conv2d_batch_leaky.1} parent=5 // pred_region
      // Predicated region
      $region25: #{conv2d_batch_leaky.1} parent=23 // pred_check
        %p128 = pneg %p29
      $region26: #{conv2d_batch_leaky.1} parent=23 // pred_check_branch
        %130 = sbr.rel (%p128) target = $region28
      $region27: #{conv2d_batch_leaky.1} parent=23 // pred_region
        %p131 = scmp.lt.s32.totalorder %s9, 1
        %s132 = scalar_select %p131, %s9, 1
        %s133 = smul.addr %s132, 4
        %s134 = smul.addr %s133, 2
        %s135 = scalar_lea.vmem %s0, %s134
      $region28: #{conv2d_batch_leaky.1} parent=23 // pred_fallthru
        _
    $region24: #{conv2d_batch_leaky.1} parent=5 // pred_fallthru
      _
    %p136 = scmp.le.s32.totalorder 1, %s9
    %p137 = scmp.lt.s32.totalorder %s9, 3
    %p138 = pnand %p136, %p137
    %p139 = pneg %p138
    // Predicated region
    $region29: #{conv2d_batch_leaky.1} parent=5 // pred_check
      _
    $region30: #{conv2d_batch_leaky.1} parent=5 // pred_check_branch
      %141 = sbr.rel (%p138) target = $region32
    $region31: #{conv2d_batch_leaky.1} parent=5 // pred_region
      %s142 = ssub.s32 %s9, 1
      %p143 = scmp.lt.s32.totalorder %s14, 1
      %s144 = scalar_select %p143, %s14, 1
      %s145 = smul.addr %s144, 4
      %s146 = smul.addr %s145, 2
      %s147 = scalar_lea.vmem %s0, %s146
      %p148 = pneg %p35
      %p149 = pneg %p32
      %p150 = pneg %p56
      %p151 = pneg %p53
      %p152 = pneg %p77
      %p153 = pneg %p74
      %p154 = pneg %p103
      %p155 = pneg %p100
      %p156 = scmp.lt.s32.totalorder %s14, 1
      %s157 = scalar_select %p156, %s14, 1
      %s158 = smul.addr %s157, 3
      %s159 = smul.addr %s158, 8
      %s160 = scalar_lea.vmem %s3, %s159
      %p161 = scmp.lt.s32.totalorder %s14, 1
      %s162 = scalar_select %p161, %s14, 1
      %s163 = smul.addr %s162, 4
      %s164 = smul.addr %s163, 2
      %s165 = scalar_lea.vmem %s0, %s164
      %p166 = scmp.lt.s32.totalorder %s14, 1
      %s167 = scalar_select %p166, %s14, 1
      %s168 = smul.addr %s167, 3
      %s169 = smul.addr %s168, 8
      %s170 = scalar_lea.vmem %s3, %s169
      %v172 = vld [vmem:[%s165] sm:$0xff]
      %v173 = vld [vmem:[%s1] sm:$0xf]
      %s174 = scalar_lea.vmem %s1, 4
      %v175 = vld [vmem:[%s174] sm:$0xf]
      %177 = vst [vmem:[#allocation1] ss:$4 sm:$0xff] %v172
      %v178 = vld.sshfl [vmem:[#allocation1] sm:$0xff pattern:$0x73625140]
      %v180 = vld.sshfl [vmem:[#allocation1 + $0x8] sm:$0xff pattern:$0x73625140]
      %v182 = vld.sshfl [vmem:[#allocation1 + $0x10] sm:$0xff pattern:$0x73625140]
      %v184 = vld.sshfl [vmem:[#allocation1 + $0x18] sm:$0xff pattern:$0x73625140]
      %186 = vrot.lane.b32.xlu0 %v178, 127
      %v187 = vpop.permute.xlu0 %186
      %188 = vrot.lane.b32.xlu0 %v180, 127
      %v189 = vpop.permute.xlu0 %188
      %190 = vrot.lane.b32.xlu0 %v182, 127
      %v191 = vpop.permute.xlu0 %190
      %192 = vrot.lane.b32.xlu0 %v184, 127
      %v193 = vpop.permute.xlu0 %192
      %vm194 = vcmask 1039360
      %v195 = vsel %vm194, %v187, %v189
      %v196 = vsel %vm194, %v189, %v191
      %v197 = vsel %vm194, %v191, %v193
      %vm198 = vcmask 31744
      %v200 = vsel %vm198, %v175, 0
      %vm202 = vcmask 1041408
      %v204 = vsel %vm202, %v195, 0
      %v207 = vsel %vm202, %v196, 0
      %v210 = vsel %vm202, %v197, 0
      %212 = vmatpush.bf16.msra.mxu0 0
      %213 = vmatpush.bf16.msra.mxu0 0
      %214 = vmatpush.bf16.msra.mxu0 0
      %215 = vmatpush.bf16.msra.mxu0 0
      %216 = vmatpush.bf16.msra.mxu0 0
      %217 = vmatpush.bf16.msra.mxu0 0
      %218 = vmatpush.bf16.msra.mxu0 0
      %219 = vmatpush.bf16.msra.mxu0 %v204
      %220 = vmatmul.bf16.gmra.mxu0 %v200
      %v221 = vpop.f32.mrf.mxu0
      %v222 = vadd.f32 0.0, %v221
      %v223 = vpop.f32.mrf.mxu0
      %224 = vdwg.mxu0
      %225 = vmatpush.bf16.msra.mxu0 0
      %226 = vmatpush.bf16.msra.mxu0 0
      %227 = vmatpush.bf16.msra.mxu0 0
      %228 = vmatpush.bf16.msra.mxu0 0
      %229 = vmatpush.bf16.msra.mxu0 0
      %230 = vmatpush.bf16.msra.mxu0 0
      %231 = vmatpush.bf16.msra.mxu0 0
      %232 = vmatpush.bf16.msra.mxu0 %v207
      %233 = vmatmul.bf16.gmra.mxu0 %v200
      %v234 = vpop.f32.mrf.mxu0
      %v235 = vadd.f32 0.0, %v234
      %v236 = vpop.f32.mrf.mxu0
      %237 = vdwg.mxu0
      %238 = vmatpush.bf16.msra.mxu0 0
      %239 = vmatpush.bf16.msra.mxu0 0
      %240 = vmatpush.bf16.msra.mxu0 0
      %241 = vmatpush.bf16.msra.mxu0 0
      %242 = vmatpush.bf16.msra.mxu0 0
      %243 = vmatpush.bf16.msra.mxu0 0
      %244 = vmatpush.bf16.msra.mxu0 0
      %245 = vmatpush.bf16.msra.mxu0 %v210
      %246 = vmatmul.bf16.gmra.mxu0 %v200
      %v247 = vpop.f32.mrf.mxu0
      %v248 = vadd.f32 0.0, %v247
      %v249 = vpop.f32.mrf.mxu0
      %250 = vdwg.mxu0
      %251 = vst [vmem:[#allocation1] ss:$4 sm:$0xff] %v172
      %v252 = vld.sshfl [vmem:[#allocation1] sm:$0xff pattern:$0x73625140]
      %v253 = vld.sshfl [vmem:[#allocation1 + $0x8] sm:$0xff pattern:$0x73625140]
      %v254 = vld.sshfl [vmem:[#allocation1 + $0x10] sm:$0xff pattern:$0x73625140]
      %v256 = vsel %vm198, %v173, 0
      %v258 = vsel %vm202, %v252, 0
      %v260 = vsel %vm202, %v253, 0
      %v262 = vsel %vm202, %v254, 0
      %264 = vmatpush.bf16.msra.mxu0 0
      %265 = vmatpush.bf16.msra.mxu0 0
      %266 = vmatpush.bf16.msra.mxu0 0
      %267 = vmatpush.bf16.msra.mxu0 0
      %268 = vmatpush.bf16.msra.mxu0 0
      %269 = vmatpush.bf16.msra.mxu0 0
      %270 = vmatpush.bf16.msra.mxu0 0
      %271 = vmatpush.bf16.msra.mxu0 %v258
      %272 = vmatmul.bf16.gmra.mxu0 %v256
      %v273 = vpop.f32.mrf.mxu0
      %v274 = vadd.f32 %v222, %v273
      %v275 = vpop.f32.mrf.mxu0
      %276 = vdwg.mxu0
      %277 = vmatpush.bf16.msra.mxu0 0
      %278 = vmatpush.bf16.msra.mxu0 0
      %279 = vmatpush.bf16.msra.mxu0 0
      %280 = vmatpush.bf16.msra.mxu0 0
      %281 = vmatpush.bf16.msra.mxu0 0
      %282 = vmatpush.bf16.msra.mxu0 0
      %283 = vmatpush.bf16.msra.mxu0 0
      %284 = vmatpush.bf16.msra.mxu0 %v260
      %285 = vmatmul.bf16.gmra.mxu0 %v256
      %v286 = vpop.f32.mrf.mxu0
      %v287 = vadd.f32 %v235, %v286
      %v288 = vpop.f32.mrf.mxu0
      %289 = vdwg.mxu0
      %290 = vmatpush.bf16.msra.mxu0 0
      %291 = vmatpush.bf16.msra.mxu0 0
      %292 = vmatpush.bf16.msra.mxu0 0
      %293 = vmatpush.bf16.msra.mxu0 0
      %294 = vmatpush.bf16.msra.mxu0 0
      %295 = vmatpush.bf16.msra.mxu0 0
      %296 = vmatpush.bf16.msra.mxu0 0
      %297 = vmatpush.bf16.msra.mxu0 %v262
      %298 = vmatmul.bf16.gmra.mxu0 %v256
      %v299 = vpop.f32.mrf.mxu0
      %v300 = vadd.f32 %v248, %v299
      %v301 = vpop.f32.mrf.mxu0
      %302 = vdwg.mxu0
      %s303 = scalar_lea.vmem %s1, 8
      %v304 = vld [vmem:[%s303] sm:$0xf]
      %305 = vst [vmem:[#allocation1] ss:$4 sm:$0xff] %v172
      %v306 = vld.sshfl [vmem:[#allocation1] sm:$0xff pattern:$0x73625140]
      %v308 = vld.sshfl [vmem:[#allocation1 + $0x8] sm:$0xff pattern:$0x73625140]
      %v310 = vld.sshfl [vmem:[#allocation1 + $0x10] sm:$0xff pattern:$0x73625140]
      %v312 = vld.sshfl [vmem:[#allocation1 + $0x18] sm:$0xff pattern:$0x73625140]
      %314 = vrot.lane.b32.xlu0 %v306, 126
      %v315 = vpop.permute.xlu0 %314
      %316 = vrot.lane.b32.xlu0 %v308, 126
      %v317 = vpop.permute.xlu0 %316
      %318 = vrot.lane.b32.xlu0 %v310, 126
      %v319 = vpop.permute.xlu0 %318
      %320 = vrot.lane.b32.xlu0 %v312, 126
      %v321 = vpop.permute.xlu0 %320
      %vm322 = vcmask 1031168
      %v323 = vsel %vm322, %v315, %v317
      %v324 = vsel %vm322, %v317, %v319
      %v325 = vsel %vm322, %v319, %v321
      %v327 = vsel %vm198, %v304, 0
      %v330 = vsel %vm202, %v323, 0
      %v333 = vsel %vm202, %v324, 0
      %v336 = vsel %vm202, %v325, 0
      %338 = vmatpush.bf16.msra.mxu0 0
      %339 = vmatpush.bf16.msra.mxu0 0
      %340 = vmatpush.bf16.msra.mxu0 0
      %341 = vmatpush.bf16.msra.mxu0 0
      %342 = vmatpush.bf16.msra.mxu0 0
      %343 = vmatpush.bf16.msra.mxu0 0
      %344 = vmatpush.bf16.msra.mxu0 0
      %345 = vmatpush.bf16.msra.mxu0 %v330
      %346 = vmatmul.bf16.gmra.mxu0 %v327
      %v347 = vpop.f32.mrf.mxu0
      %v348 = vadd.f32 0.0, %v347
      %v349 = vpop.f32.mrf.mxu0
      %350 = vdwg.mxu0
      %351 = vmatpush.bf16.msra.mxu0 0
      %352 = vmatpush.bf16.msra.mxu0 0
      %353 = vmatpush.bf16.msra.mxu0 0
      %354 = vmatpush.bf16.msra.mxu0 0
      %355 = vmatpush.bf16.msra.mxu0 0
      %356 = vmatpush.bf16.msra.mxu0 0
      %357 = vmatpush.bf16.msra.mxu0 0
      %358 = vmatpush.bf16.msra.mxu0 %v333
      %359 = vmatmul.bf16.gmra.mxu0 %v327
      %v360 = vpop.f32.mrf.mxu0
      %v361 = vadd.f32 0.0, %v360
      %v362 = vpop.f32.mrf.mxu0
      %363 = vdwg.mxu0
      %364 = vmatpush.bf16.msra.mxu0 0
      %365 = vmatpush.bf16.msra.mxu0 0
      %366 = vmatpush.bf16.msra.mxu0 0
      %367 = vmatpush.bf16.msra.mxu0 0
      %368 = vmatpush.bf16.msra.mxu0 0
      %369 = vmatpush.bf16.msra.mxu0 0
      %370 = vmatpush.bf16.msra.mxu0 0
      %371 = vmatpush.bf16.msra.mxu0 %v336
      %372 = vmatmul.bf16.gmra.mxu0 %v327
      %v373 = vpop.f32.mrf.mxu0
      %v374 = vadd.f32 0.0, %v373
      %v375 = vpop.f32.mrf.mxu0
      %376 = vdwg.mxu0
      %v377 = vadd.f32 %v274, %v348
      %v378 = vadd.f32 %v287, %v361
      %v379 = vadd.f32 %v300, %v374
      %s380 = scalar_lea.vmem %s1, 12
      %v381 = vld [vmem:[%s380] sm:$0xf]
      %382 = vst [vmem:[#allocation1] ss:$4 sm:$0xff] %v172
      %v383 = vld.sshfl [vmem:[#allocation1] sm:$0xff pattern:$0x73625140]
      %v385 = vld.sshfl [vmem:[#allocation1 + $0x8] sm:$0xff pattern:$0x73625140]
      %v387 = vld.sshfl [vmem:[#allocation1 + $0x10] sm:$0xff pattern:$0x73625140]
      %v389 = vld.sshfl [vmem:[#allocation1 + $0x18] sm:$0xff pattern:$0x73625140]
      %391 = vrot.lane.b32.xlu0 %v383, 110
      %v392 = vpop.permute.xlu0 %391
      %393 = vrot.lane.b32.xlu0 %v385, 110
      %v394 = vpop.permute.xlu0 %393
      %395 = vrot.lane.b32.xlu0 %v387, 110
      %v396 = vpop.permute.xlu0 %395
      %397 = vrot.lane.b32.xlu0 %v389, 110
      %v398 = vpop.permute.xlu0 %397
      %vm399 = vcmask 900096
      %v400 = vsel %vm399, %v392, %v394
      %v401 = vsel %vm399, %v394, %v396
      %v402 = vsel %vm399, %v396, %v398
      %v404 = vsel %vm198, %v381, 0
      %v407 = vsel %vm202, %v400, 0
      %v410 = vsel %vm202, %v401, 0
      %v413 = vsel %vm202, %v402, 0
      %415 = vmatpush.bf16.msra.mxu0 0
      %416 = vmatpush.bf16.msra.mxu0 0
      %417 = vmatpush.bf16.msra.mxu0 0
      %418 = vmatpush.bf16.msra.mxu0 0
      %419 = vmatpush.bf16.msra.mxu0 0
      %420 = vmatpush.bf16.msra.mxu0 0
      %421 = vmatpush.bf16.msra.mxu0 0
      %422 = vmatpush.bf16.msra.mxu0 %v407
      %423 = vmatmul.bf16.gmra.mxu0 %v404
      %v424 = vpop.f32.mrf.mxu0
      %v425 = vadd.f32 0.0, %v424
      %v426 = vpop.f32.mrf.mxu0
      %427 = vdwg.mxu0
      %428 = vmatpush.bf16.msra.mxu0 0
      %429 = vmatpush.bf16.msra.mxu0 0
      %430 = vmatpush.bf16.msra.mxu0 0
      %431 = vmatpush.bf16.msra.mxu0 0
      %432 = vmatpush.bf16.msra.mxu0 0
      %433 = vmatpush.bf16.msra.mxu0 0
      %434 = vmatpush.bf16.msra.mxu0 0
      %435 = vmatpush.bf16.msra.mxu0 %v410
      %436 = vmatmul.bf16.gmra.mxu0 %v404
      %v437 = vpop.f32.mrf.mxu0
      %v438 = vadd.f32 0.0, %v437
      %v439 = vpop.f32.mrf.mxu0
      %440 = vdwg.mxu0
      %441 = vmatpush.bf16.msra.mxu0 0
      %442 = vmatpush.bf16.msra.mxu0 0
      %443 = vmatpush.bf16.msra.mxu0 0
      %444 = vmatpush.bf16.msra.mxu0 0
      %445 = vmatpush.bf16.msra.mxu0 0
      %446 = vmatpush.bf16.msra.mxu0 0
      %447 = vmatpush.bf16.msra.mxu0 0
      %448 = vmatpush.bf16.msra.mxu0 %v413
      %449 = vmatmul.bf16.gmra.mxu0 %v404
      %v450 = vpop.f32.mrf.mxu0
      %v451 = vadd.f32 0.0, %v450
      %v452 = vpop.f32.mrf.mxu0
      %453 = vdwg.mxu0
      %v454 = vadd.f32 %v377, %v425
      %v455 = vadd.f32 %v378, %v438
      %v456 = vadd.f32 %v379, %v451
      %s457 = scalar_lea.vmem %s1, 16
      %v458 = vld [vmem:[%s457] sm:$0xf]
      %459 = vst [vmem:[#allocation1] ss:$4 sm:$0xff] %v172
      %v460 = vld.sshfl [vmem:[#allocation1] sm:$0xff pattern:$0x73625140]
      %v462 = vld.sshfl [vmem:[#allocation1 + $0x8] sm:$0xff pattern:$0x73625140]
      %v464 = vld.sshfl [vmem:[#allocation1 + $0x10] sm:$0xff pattern:$0x73625140]
      %v466 = vld.sshfl [vmem:[#allocation1 + $0x18] sm:$0xff pattern:$0x73625140]
      %468 = vrot.lane.b32.xlu0 %v460, 109
      %v469 = vpop.permute.xlu0 %468
      %470 = vrot.lane.b32.xlu0 %v462, 109
      %v471 = vpop.permute.xlu0 %470
      %472 = vrot.lane.b32.xlu0 %v464, 109
      %v473 = vpop.permute.xlu0 %472
      %474 = vrot.lane.b32.xlu0 %v466, 109
      %v475 = vpop.permute.xlu0 %474
      %vm476 = vcmask 891904
      %v477 = vsel %vm476, %v469, %v471
      %v478 = vsel %vm476, %v471, %v473
      %v479 = vsel %vm476, %v473, %v475
      %v481 = vsel %vm198, %v458, 0
      %v484 = vsel %vm202, %v477, 0
      %v487 = vsel %vm202, %v478, 0
      %v490 = vsel %vm202, %v479, 0
      %492 = vmatpush.bf16.msra.mxu0 0
      %493 = vmatpush.bf16.msra.mxu0 0
      %494 = vmatpush.bf16.msra.mxu0 0
      %495 = vmatpush.bf16.msra.mxu0 0
      %496 = vmatpush.bf16.msra.mxu0 0
      %497 = vmatpush.bf16.msra.mxu0 0
      %498 = vmatpush.bf16.msra.mxu0 0
      %499 = vmatpush.bf16.msra.mxu0 %v484
      %500 = vmatmul.bf16.gmra.mxu0 %v481
      %v501 = vpop.f32.mrf.mxu0
      %v502 = vadd.f32 0.0, %v501
      %v503 = vpop.f32.mrf.mxu0
      %504 = vdwg.mxu0
      %505 = vmatpush.bf16.msra.mxu0 0
      %506 = vmatpush.bf16.msra.mxu0 0
      %507 = vmatpush.bf16.msra.mxu0 0
      %508 = vmatpush.bf16.msra.mxu0 0
      %509 = vmatpush.bf16.msra.mxu0 0
      %510 = vmatpush.bf16.msra.mxu0 0
      %511 = vmatpush.bf16.msra.mxu0 0
      %512 = vmatpush.bf16.msra.mxu0 %v487
      %513 = vmatmul.bf16.gmra.mxu0 %v481
      %v514 = vpop.f32.mrf.mxu0
      %v515 = vadd.f32 0.0, %v514
      %v516 = vpop.f32.mrf.mxu0
      %517 = vdwg.mxu0
      %518 = vmatpush.bf16.msra.mxu0 0
      %519 = vmatpush.bf16.msra.mxu0 0
      %520 = vmatpush.bf16.msra.mxu0 0
      %521 = vmatpush.bf16.msra.mxu0 0
      %522 = vmatpush.bf16.msra.mxu0 0
      %523 = vmatpush.bf16.msra.mxu0 0
      %524 = vmatpush.bf16.msra.mxu0 0
      %525 = vmatpush.bf16.msra.mxu0 %v490
      %526 = vmatmul.bf16.gmra.mxu0 %v481
      %v527 = vpop.f32.mrf.mxu0
      %v528 = vadd.f32 0.0, %v527
      %v529 = vpop.f32.mrf.mxu0
      %530 = vdwg.mxu0
      %v531 = vadd.f32 %v454, %v502
      %v532 = vadd.f32 %v455, %v515
      %v533 = vadd.f32 %v456, %v528
      %s534 = scalar_lea.vmem %s1, 20
      %v535 = vld [vmem:[%s534] sm:$0xf]
      %536 = vst [vmem:[#allocation1] ss:$4 sm:$0xff] %v172
      %v537 = vld.sshfl [vmem:[#allocation1] sm:$0xff pattern:$0x73625140]
      %v539 = vld.sshfl [vmem:[#allocation1 + $0x8] sm:$0xff pattern:$0x73625140]
      %v541 = vld.sshfl [vmem:[#allocation1 + $0x10] sm:$0xff pattern:$0x73625140]
      %v543 = vld.sshfl [vmem:[#allocation1 + $0x18] sm:$0xff pattern:$0x73625140]
      %545 = vrot.lane.b32.xlu0 %v537, 108
      %v546 = vpop.permute.xlu0 %545
      %547 = vrot.lane.b32.xlu0 %v539, 108
      %v548 = vpop.permute.xlu0 %547
      %549 = vrot.lane.b32.xlu0 %v541, 108
      %v550 = vpop.permute.xlu0 %549
      %551 = vrot.lane.b32.xlu0 %v543, 108
      %v552 = vpop.permute.xlu0 %551
      %vm553 = vcmask 883712
      %v554 = vsel %vm553, %v546, %v548
      %v555 = vsel %vm553, %v548, %v550
      %v556 = vsel %vm553, %v550, %v552
      %v558 = vsel %vm198, %v535, 0
      %v561 = vsel %vm202, %v554, 0
      %v564 = vsel %vm202, %v555, 0
      %v567 = vsel %vm202, %v556, 0
      %569 = vmatpush.bf16.msra.mxu0 0
      %570 = vmatpush.bf16.msra.mxu0 0
      %571 = vmatpush.bf16.msra.mxu0 0
      %572 = vmatpush.bf16.msra.mxu0 0
      %573 = vmatpush.bf16.msra.mxu0 0
      %574 = vmatpush.bf16.msra.mxu0 0
      %575 = vmatpush.bf16.msra.mxu0 0
      %576 = vmatpush.bf16.msra.mxu0 %v561
      %577 = vmatmul.bf16.gmra.mxu0 %v558
      %v578 = vpop.f32.mrf.mxu0
      %v579 = vadd.f32 0.0, %v578
      %v580 = vpop.f32.mrf.mxu0
      %581 = vdwg.mxu0
      %582 = vmatpush.bf16.msra.mxu0 0
      %583 = vmatpush.bf16.msra.mxu0 0
      %584 = vmatpush.bf16.msra.mxu0 0
      %585 = vmatpush.bf16.msra.mxu0 0
      %586 = vmatpush.bf16.msra.mxu0 0
      %587 = vmatpush.bf16.msra.mxu0 0
      %588 = vmatpush.bf16.msra.mxu0 0
      %589 = vmatpush.bf16.msra.mxu0 %v564
      %590 = vmatmul.bf16.gmra.mxu0 %v558
      %v591 = vpop.f32.mrf.mxu0
      %v592 = vadd.f32 0.0, %v591
      %v593 = vpop.f32.mrf.mxu0
      %594 = vdwg.mxu0
      %595 = vmatpush.bf16.msra.mxu0 0
      %596 = vmatpush.bf16.msra.mxu0 0
      %597 = vmatpush.bf16.msra.mxu0 0
      %598 = vmatpush.bf16.msra.mxu0 0
      %599 = vmatpush.bf16.msra.mxu0 0
      %600 = vmatpush.bf16.msra.mxu0 0
      %601 = vmatpush.bf16.msra.mxu0 0
      %602 = vmatpush.bf16.msra.mxu0 %v567
      %603 = vmatmul.bf16.gmra.mxu0 %v558
      %v604 = vpop.f32.mrf.mxu0
      %v605 = vadd.f32 0.0, %v604
      %v606 = vpop.f32.mrf.mxu0
      %607 = vdwg.mxu0
      %v608 = vadd.f32 %v531, %v579
      %v609 = vadd.f32 %v532, %v592
      %v610 = vadd.f32 %v533, %v605
      %s611 = scalar_lea.vmem %s1, 24
      %v612 = vld [vmem:[%s611] sm:$0xf]
      %613 = vst [vmem:[#allocation1] ss:$4 sm:$0xff] %v172
      %v614 = vld.sshfl [vmem:[#allocation1] sm:$0xff pattern:$0x73625140]
      %v616 = vld.sshfl [vmem:[#allocation1 + $0x8] sm:$0xff pattern:$0x73625140]
      %v618 = vld.sshfl [vmem:[#allocation1 + $0x10] sm:$0xff pattern:$0x73625140]
      %v620 = vld.sshfl [vmem:[#allocation1 + $0x18] sm:$0xff pattern:$0x73625140]
      %622 = vrot.lane.b32.xlu0 %v614, 92
      %v623 = vpop.permute.xlu0 %622
      %624 = vrot.lane.b32.xlu0 %v616, 92
      %v625 = vpop.permute.xlu0 %624
      %626 = vrot.lane.b32.xlu0 %v618, 92
      %v627 = vpop.permute.xlu0 %626
      %628 = vrot.lane.b32.xlu0 %v620, 92
      %v629 = vpop.permute.xlu0 %628
      %vm630 = vcmask 752640
      %v631 = vsel %vm630, %v623, %v625
      %v632 = vsel %vm630, %v625, %v627
      %v633 = vsel %vm630, %v627, %v629
      %v635 = vsel %vm198, %v612, 0
      %v638 = vsel %vm202, %v631, 0
      %v641 = vsel %vm202, %v632, 0
      %v644 = vsel %vm202, %v633, 0
      %646 = vmatpush.bf16.msra.mxu0 0
      %647 = vmatpush.bf16.msra.mxu0 0
      %648 = vmatpush.bf16.msra.mxu0 0
      %649 = vmatpush.bf16.msra.mxu0 0
      %650 = vmatpush.bf16.msra.mxu0 0
      %651 = vmatpush.bf16.msra.mxu0 0
      %652 = vmatpush.bf16.msra.mxu0 0
      %653 = vmatpush.bf16.msra.mxu0 %v638
      %654 = vmatmul.bf16.gmra.mxu0 %v635
      %v655 = vpop.f32.mrf.mxu0
      %v656 = vadd.f32 0.0, %v655
      %v657 = vpop.f32.mrf.mxu0
      %658 = vdwg.mxu0
      %659 = vmatpush.bf16.msra.mxu0 0
      %660 = vmatpush.bf16.msra.mxu0 0
      %661 = vmatpush.bf16.msra.mxu0 0
      %662 = vmatpush.bf16.msra.mxu0 0
      %663 = vmatpush.bf16.msra.mxu0 0
      %664 = vmatpush.bf16.msra.mxu0 0
      %665 = vmatpush.bf16.msra.mxu0 0
      %666 = vmatpush.bf16.msra.mxu0 %v641
      %667 = vmatmul.bf16.gmra.mxu0 %v635
      %v668 = vpop.f32.mrf.mxu0
      %v669 = vadd.f32 0.0, %v668
      %v670 = vpop.f32.mrf.mxu0
      %671 = vdwg.mxu0
      %672 = vmatpush.bf16.msra.mxu0 0
      %673 = vmatpush.bf16.msra.mxu0 0
      %674 = vmatpush.bf16.msra.mxu0 0
      %675 = vmatpush.bf16.msra.mxu0 0
      %676 = vmatpush.bf16.msra.mxu0 0
      %677 = vmatpush.bf16.msra.mxu0 0
      %678 = vmatpush.bf16.msra.mxu0 0
      %679 = vmatpush.bf16.msra.mxu0 %v644
      %680 = vmatmul.bf16.gmra.mxu0 %v635
      %v681 = vpop.f32.mrf.mxu0
      %v682 = vadd.f32 0.0, %v681
      %v683 = vpop.f32.mrf.mxu0
      %684 = vdwg.mxu0
      %v685 = vadd.f32 %v608, %v656
      %v686 = vadd.f32 %v609, %v669
      %v687 = vadd.f32 %v610, %v682
      %s688 = scalar_lea.vmem %s1, 28
      %v689 = vld [vmem:[%s688] sm:$0xf]
      %690 = vst [vmem:[#allocation1] ss:$4 sm:$0xff] %v172
      %v691 = vld.sshfl [vmem:[#allocation1] sm:$0xff pattern:$0x73625140]
      %v693 = vld.sshfl [vmem:[#allocation1 + $0x8] sm:$0xff pattern:$0x73625140]
      %v695 = vld.sshfl [vmem:[#allocation1 + $0x10] sm:$0xff pattern:$0x73625140]
      %v697 = vld.sshfl [vmem:[#allocation1 + $0x18] sm:$0xff pattern:$0x73625140]
      %699 = vrot.lane.b32.xlu0 %v691, 91
      %v700 = vpop.permute.xlu0 %699
      %701 = vrot.lane.b32.xlu0 %v693, 91
      %v702 = vpop.permute.xlu0 %701
      %703 = vrot.lane.b32.xlu0 %v695, 91
      %v704 = vpop.permute.xlu0 %703
      %705 = vrot.lane.b32.xlu0 %v697, 91
      %v706 = vpop.permute.xlu0 %705
      %vm707 = vcmask 744448
      %v708 = vsel %vm707, %v700, %v702
      %v709 = vsel %vm707, %v702, %v704
      %v710 = vsel %vm707, %v704, %v706
      %v712 = vsel %vm198, %v689, 0
      %v715 = vsel %vm202, %v708, 0
      %v718 = vsel %vm202, %v709, 0
      %v721 = vsel %vm202, %v710, 0
      %723 = vmatpush.bf16.msra.mxu0 0
      %724 = vmatpush.bf16.msra.mxu0 0
      %725 = vmatpush.bf16.msra.mxu0 0
      %726 = vmatpush.bf16.msra.mxu0 0
      %727 = vmatpush.bf16.msra.mxu0 0
      %728 = vmatpush.bf16.msra.mxu0 0
      %729 = vmatpush.bf16.msra.mxu0 0
      %730 = vmatpush.bf16.msra.mxu0 %v715
      %731 = vmatmul.bf16.gmra.mxu0 %v712
      %v732 = vpop.f32.mrf.mxu0
      %v733 = vadd.f32 0.0, %v732
      %v734 = vpop.f32.mrf.mxu0
      %735 = vdwg.mxu0
      %736 = vmatpush.bf16.msra.mxu0 0
      %737 = vmatpush.bf16.msra.mxu0 0
      %738 = vmatpush.bf16.msra.mxu0 0
      %739 = vmatpush.bf16.msra.mxu0 0
      %740 = vmatpush.bf16.msra.mxu0 0
      %741 = vmatpush.bf16.msra.mxu0 0
      %742 = vmatpush.bf16.msra.mxu0 0
      %743 = vmatpush.bf16.msra.mxu0 %v718
      %744 = vmatmul.bf16.gmra.mxu0 %v712
      %v745 = vpop.f32.mrf.mxu0
      %v746 = vadd.f32 0.0, %v745
      %v747 = vpop.f32.mrf.mxu0
      %748 = vdwg.mxu0
      %749 = vmatpush.bf16.msra.mxu0 0
      %750 = vmatpush.bf16.msra.mxu0 0
      %751 = vmatpush.bf16.msra.mxu0 0
      %752 = vmatpush.bf16.msra.mxu0 0
      %753 = vmatpush.bf16.msra.mxu0 0
      %754 = vmatpush.bf16.msra.mxu0 0
      %755 = vmatpush.bf16.msra.mxu0 0
      %756 = vmatpush.bf16.msra.mxu0 %v721
      %757 = vmatmul.bf16.gmra.mxu0 %v712
      %v758 = vpop.f32.mrf.mxu0
      %v759 = vadd.f32 0.0, %v758
      %v760 = vpop.f32.mrf.mxu0
      %761 = vdwg.mxu0
      %v762 = vadd.f32 %v685, %v733
      %v763 = vadd.f32 %v686, %v746
      %v764 = vadd.f32 %v687, %v759
      %s765 = scalar_lea.vmem %s1, 32
      %v766 = vld [vmem:[%s765] sm:$0xf]
      %767 = vst [vmem:[#allocation1] ss:$4 sm:$0xff] %v172
      %v768 = vld.sshfl [vmem:[#allocation1] sm:$0xff pattern:$0x73625140]
      %v770 = vld.sshfl [vmem:[#allocation1 + $0x8] sm:$0xff pattern:$0x73625140]
      %v772 = vld.sshfl [vmem:[#allocation1 + $0x10] sm:$0xff pattern:$0x73625140]
      %v774 = vld.sshfl [vmem:[#allocation1 + $0x18] sm:$0xff pattern:$0x73625140]
      %776 = vrot.lane.b32.xlu0 %v768, 90
      %v777 = vpop.permute.xlu0 %776
      %778 = vrot.lane.b32.xlu0 %v770, 90
      %v779 = vpop.permute.xlu0 %778
      %780 = vrot.lane.b32.xlu0 %v772, 90
      %v781 = vpop.permute.xlu0 %780
      %782 = vrot.lane.b32.xlu0 %v774, 90
      %v783 = vpop.permute.xlu0 %782
      %vm784 = vcmask 736256
      %v785 = vsel %vm784, %v777, %v779
      %v786 = vsel %vm784, %v779, %v781
      %v787 = vsel %vm784, %v781, %v783
      %v789 = vsel %vm198, %v766, 0
      %v792 = vsel %vm202, %v785, 0
      %v795 = vsel %vm202, %v786, 0
      %v798 = vsel %vm202, %v787, 0
      %800 = vmatpush.bf16.msra.mxu0 0
      %801 = vmatpush.bf16.msra.mxu0 0
      %802 = vmatpush.bf16.msra.mxu0 0
      %803 = vmatpush.bf16.msra.mxu0 0
      %804 = vmatpush.bf16.msra.mxu0 0
      %805 = vmatpush.bf16.msra.mxu0 0
      %806 = vmatpush.bf16.msra.mxu0 0
      %807 = vmatpush.bf16.msra.mxu0 %v792
      %808 = vmatmul.bf16.gmra.mxu0 %v789
      %v809 = vpop.f32.mrf.mxu0
      %v810 = vadd.f32 0.0, %v809
      %v811 = vpop.f32.mrf.mxu0
      %812 = vdwg.mxu0
      %813 = vmatpush.bf16.msra.mxu0 0
      %814 = vmatpush.bf16.msra.mxu0 0
      %815 = vmatpush.bf16.msra.mxu0 0
      %816 = vmatpush.bf16.msra.mxu0 0
      %817 = vmatpush.bf16.msra.mxu0 0
      %818 = vmatpush.bf16.msra.mxu0 0
      %819 = vmatpush.bf16.msra.mxu0 0
      %820 = vmatpush.bf16.msra.mxu0 %v795
      %821 = vmatmul.bf16.gmra.mxu0 %v789
      %v822 = vpop.f32.mrf.mxu0
      %v823 = vadd.f32 0.0, %v822
      %v824 = vpop.f32.mrf.mxu0
      %825 = vdwg.mxu0
      %826 = vmatpush.bf16.msra.mxu0 0
      %827 = vmatpush.bf16.msra.mxu0 0
      %828 = vmatpush.bf16.msra.mxu0 0
      %829 = vmatpush.bf16.msra.mxu0 0
      %830 = vmatpush.bf16.msra.mxu0 0
      %831 = vmatpush.bf16.msra.mxu0 0
      %832 = vmatpush.bf16.msra.mxu0 0
      %833 = vmatpush.bf16.msra.mxu0 %v798
      %834 = vmatmul.bf16.gmra.mxu0 %v789
      %v835 = vpop.f32.mrf.mxu0
      %v836 = vadd.f32 0.0, %v835
      %v837 = vpop.f32.mrf.mxu0
      %838 = vdwg.mxu0
      %v839 = vadd.f32 %v762, %v810
      %v840 = vadd.f32 %v763, %v823
      %v841 = vadd.f32 %v764, %v836
      %v842 = vld [vmem:[%s2] sm:$0xff]
      %844 = vset.pattern.permute.xlu0 0
      %845 = vperm.xlu0 %844, %v842
      %v846 = vpop.permute.xlu0 %845
      %v848 = vadd.f32 %v839, %v846
      %v849 = vadd.f32 %v840, %v846
      %v850 = vadd.f32 %v841, %v846
      %vm851 = vcmp.gt.f32.partialorder %v848, 0.0
      %vm852 = vcmp.gt.f32.partialorder %v849, 0.0
      %vm853 = vcmp.gt.f32.partialorder %v850, 0.0
      %v854 = vmul.f32 %v848, 0.1
      %v855 = vmul.f32 %v849, 0.1
      %v856 = vmul.f32 %v850, 0.1
      %v857 = vsel %vm851, %v848, %v854
      %v858 = vsel %vm852, %v849, %v855
      %v859 = vsel %vm853, %v850, %v856
      %860 = vst [vmem:[%s170] sm:$0xff] %v857
      %861 = vst [vmem:[%s170 + $0x8] sm:$0xff] %v858
      %862 = vst [vmem:[%s170 + $0x10] sm:$0xff] %v859
      %p863 = scmp.lt.s32.totalorder %s14, 1
      %s864 = scalar_select %p863, %s14, 1
      %s865 = smul.addr %s864, 3
      %s866 = smul.addr %s865, 8
      %s867 = scalar_lea.vmem %s3, %s866
      // Predicated region
      $region33: #{conv2d_batch_leaky.1} parent=31 // pred_check
        %p868 = pneg %p100
      $region34: #{conv2d_batch_leaky.1} parent=31 // pred_check_branch
        %870 = sbr.rel (%p868) target = $region36
      $region35: #{conv2d_batch_leaky.1} parent=31 // pred_region
        _
      $region36: #{conv2d_batch_leaky.1} parent=31 // pred_fallthru
        _
    $region32: #{conv2d_batch_leaky.1} parent=5 // pred_fallthru
      _
    %p871 = scmp.le.s32.totalorder 2, %s9
    // Predicated region
    $region37: #{conv2d_batch_leaky.1} parent=5 // pred_check
      %p872 = pneg %p871
    $region38: #{conv2d_batch_leaky.1} parent=5 // pred_check_branch
      %874 = sbr.rel (%p872) target = $region40
    $region39: #{conv2d_batch_leaky.1} parent=5 // pred_region
      %s875 = ssub.s32 %s9, 2
      // Predicated region
      $region41: #{conv2d_batch_leaky.1} parent=39 // pred_check
        %p876 = pneg %p106
      $region42: #{conv2d_batch_leaky.1} parent=39 // pred_check_branch
        %878 = sbr.rel (%p876) target = $region44
      $region43: #{conv2d_batch_leaky.1} parent=39 // pred_region
        %p879 = scmp.lt.s32.totalorder %s15, 1
        %s880 = scalar_select %p879, %s15, 1
        %s881 = smul.addr %s880, 3
        %s882 = smul.addr %s881, 8
        %s883 = scalar_lea.vmem %s3, %s882
      $region44: #{conv2d_batch_leaky.1} parent=39 // pred_fallthru
        _
    $region40: #{conv2d_batch_leaky.1} parent=5 // pred_fallthru
      _
  $region6: #{conv2d_batch_leaky.1} parent=0 // loop_footer
    %s13 = sadd.s32 1, %s9
  $region7: #{conv2d_batch_leaky.1} parent=0 // loop_footer_branch
    %8 = sbr.rel target = $region3
  $region8: #{conv2d_batch_leaky.1} parent=0 // loop_exit
    _

</llo_original>
